<compile_context>
chip_gen: v6e
topology: v6e:2x2x1
jax: 0.10.0
libtpu: 0.0.40
codegen_flags: <defaults>
</compile_context>

<pallas_src>
import functools
import math

import jax
import jax.numpy as jnp
from jax.experimental import pallas as pl
from jax.experimental.pallas import tpu as pltpu


# ------------------------------ tiling helpers --------------------------------

_VMEM_LIMIT = 32 * 1024 * 1024  # explicit scoped-VMEM budget; safe on v5e/v6e/v7x


def _fit_tile(dim, preferred, granularity):
    """Largest tile <= preferred that is a multiple of `granularity` and divides
    `dim` exactly; falls back to the full dimension (always a legal block)."""
    if dim <= preferred:
        return dim
    t = (preferred // granularity) * granularity
    while t >= granularity:
        if dim % t == 0:
            return t
        t -= granularity
    return dim


def _cparams(dim_sem):
    return pltpu.CompilerParams(dimension_semantics=dim_sem,
                                vmem_limit_bytes=_VMEM_LIMIT)


# ----------------------- tiled linear (+bias, +activation) --------------------

def _linear_kernel(x_ref, w_ref, b_ref, o_ref, acc_ref, *, activation, n_k):
    @pl.when(pl.program_id(2) == 0)
    def _init():
        acc_ref[...] = jnp.zeros_like(acc_ref)

    acc_ref[...] += jnp.dot(x_ref[...], w_ref[...],
                            preferred_element_type=jnp.float32)

    @pl.when(pl.program_id(2) == n_k - 1)
    def _finalize():
        y = acc_ref[...] + b_ref[...].astype(jnp.float32)
        if activation == "gelu":
            # TODO(synk): HF BertIntermediate defaults to exact erf GELU; tanh
            # approximation kept for guaranteed Mosaic lowering (tiny numeric delta).
            y = 0.5 * y * (1.0 + jnp.tanh(0.7978845608028654
                                          * (y + 0.044715 * y * y * y)))
        elif activation == "tanh":
            y = jnp.tanh(y)
        o_ref[...] = y.astype(o_ref.dtype)


def linear(x, w, b, activation=None, out_dtype=jnp.bfloat16,
           tm_pref=256, tn_pref=256, tk_pref=512):
    """x:(M,K) @ w:(K,N) + b:(1,N), tiled/pipelined, optional fused activation."""
    M, K = x.shape
    N = w.shape[1]
    tm = _fit_tile(M, tm_pref, 8)
    tn = _fit_tile(N, tn_pref, 128)
    tk = _fit_tile(K, tk_pref, 128)
    n_m, n_n, n_k = M // tm, N // tn, K // tk
    return pl.pallas_call(
        functools.partial(_linear_kernel, activation=activation, n_k=n_k),
        out_shape=jax.ShapeDtypeStruct((M, N), out_dtype),
        grid=(n_m, n_n, n_k),
        in_specs=[
            pl.BlockSpec((tm, tk), lambda i, j, k: (i, k)),
            pl.BlockSpec((tk, tn), lambda i, j, k: (k, j)),
            pl.BlockSpec((1, tn), lambda i, j, k: (0, j)),   # bias per N-tile only
        ],
        out_specs=pl.BlockSpec((tm, tn), lambda i, j, k: (i, j)),
        scratch_shapes=[pltpu.VMEM((tm, tn), jnp.float32)],
        compiler_params=_cparams(("parallel", "parallel", "arbitrary")),
    )(x, w, b)


# --------------- tiled linear + bias + residual + LayerNorm fusion ------------

def _linear_res_ln_kernel(x_ref, w_ref, b_ref, r_ref, g_ref, beta_ref, o_ref,
                          acc_ref, *, n_k, eps):
    @pl.when(pl.program_id(1) == 0)
    def _init():
        acc_ref[...] = jnp.zeros_like(acc_ref)

    acc_ref[...] += jnp.dot(x_ref[...], w_ref[...],
                            preferred_element_type=jnp.float32)

    @pl.when(pl.program_id(1) == n_k - 1)
    def _finalize():
        y = (acc_ref[...] + b_ref[...].astype(jnp.float32)
             + r_ref[...].astype(jnp.float32))
        mean = jnp.mean(y, axis=-1, keepdims=True)
        var = jnp.mean(jnp.square(y - mean), axis=-1, keepdims=True)
        y = (y - mean) * jax.lax.rsqrt(var + eps)
        o_ref[...] = (y * g_ref[...].astype(jnp.float32)
                      + beta_ref[...].astype(jnp.float32)).astype(o_ref.dtype)


def linear_residual_layernorm(x, w, b, residual, gamma, beta,
                              out_dtype=jnp.bfloat16, eps=1e-12,
                              tm_pref=256, tk_pref=512):
    """LayerNorm(residual + x @ w + b).  N (=hidden) is kept whole so the LN
    reduction sees the full row; M and K are tiled/pipelined."""
    M, K = x.shape
    N = w.shape[1]
    tm = _fit_tile(M, tm_pref, 8)
    tk = _fit_tile(K, tk_pref, 128)
    n_m, n_k = M // tm, K // tk
    return pl.pallas_call(
        functools.partial(_linear_res_ln_kernel, n_k=n_k, eps=eps),
        out_shape=jax.ShapeDtypeStruct((M, N), out_dtype),
        grid=(n_m, n_k),
        in_specs=[
            pl.BlockSpec((tm, tk), lambda i, k: (i, k)),
            pl.BlockSpec((tk, N), lambda i, k: (k, 0)),
            pl.BlockSpec((1, N), lambda i, k: (0, 0)),
            pl.BlockSpec((tm, N), lambda i, k: (i, 0)),      # residual tile
            pl.BlockSpec((1, N), lambda i, k: (0, 0)),       # gamma
            pl.BlockSpec((1, N), lambda i, k: (0, 0)),       # beta
        ],
        out_specs=pl.BlockSpec((tm, N), lambda i, k: (i, 0)),
        scratch_shapes=[pltpu.VMEM((tm, N), jnp.float32)],
        compiler_params=_cparams(("parallel", "arbitrary")),
    )(x, w, b, residual, gamma, beta)


# ------------------------- standalone layernorm (embeddings) ------------------

def _layernorm_kernel(x_ref, g_ref, b_ref, o_ref, *, eps):
    x = x_ref[...].astype(jnp.float32)
    mean = jnp.mean(x, axis=-1, keepdims=True)
    var = jnp.mean(jnp.square(x - mean), axis=-1, keepdims=True)
    y = (x - mean) * jax.lax.rsqrt(var + eps)
    o_ref[...] = (y * g_ref[...].astype(jnp.float32)
                  + b_ref[...].astype(jnp.float32)).astype(o_ref.dtype)


def layernorm(x, g, b, out_dtype=jnp.bfloat16, eps=1e-12, tm_pref=512):
    M, H = x.shape
    tm = _fit_tile(M, tm_pref, 8)
    return pl.pallas_call(
        functools.partial(_layernorm_kernel, eps=eps),
        out_shape=jax.ShapeDtypeStruct((M, H), out_dtype),
        grid=(M // tm,),
        in_specs=[
            pl.BlockSpec((tm, H), lambda i: (i, 0)),
            pl.BlockSpec((1, H), lambda i: (0, 0)),
            pl.BlockSpec((1, H), lambda i: (0, 0)),
        ],
        out_specs=pl.BlockSpec((tm, H), lambda i: (i, 0)),
        compiler_params=_cparams(("parallel",)),
    )(x, g, b)


# ------------------------------- attention ------------------------------------

def _attn_kernel(qkv_ref, m_ref, o_ref, *, n_heads, dh, scale):
    qkv = qkv_ref[0]                                   # (S, 3H), bf16
    mask = m_ref[0].astype(jnp.float32)                # (1, S) additive mask
    H = n_heads * dh
    heads = []
    for h in range(n_heads):                           # static unroll; heads stay lane slices
        q = qkv[:, h * dh:(h + 1) * dh]
        k = qkv[:, H + h * dh:H + (h + 1) * dh]
        v = qkv[:, 2 * H + h * dh:2 * H + (h + 1) * dh]
        # contract the head dim directly — no explicit k.T relayout before the MXU
        s = jax.lax.dot_general(q, k, (((1,), (1,)), ((), ())),
                                preferred_element_type=jnp.float32) * scale
        s = s + mask
        s = s - jnp.max(s, axis=-1, keepdims=True)
        p = jnp.exp(s)
        p = p * pl.reciprocal(jnp.sum(p, axis=-1, keepdims=True), approx=True)
        heads.append(jnp.dot(p.astype(qkv.dtype), v,
                             preferred_element_type=jnp.float32))
    # concatenate heads -> a single lane-dense (S, H) store
    o_ref[0] = jnp.concatenate(heads, axis=-1).astype(o_ref.dtype)


def attention(qkv, add_mask, n_heads):
    """qkv: (B, S, 3H) packed [Q|K|V]; add_mask: (B, 1, S) additive -> (B, S, H)."""
    B, S, threeH = qkv.shape
    H = threeH // 3
    dh = H // n_heads
    # TODO(synk): for long sequences convert to a KV-tiled online-softmax (flash)
    # loop with m/l/acc scratch so the SxS scores never pressure v7x's 64 MiB VMEM.
    return pl.pallas_call(
        functools.partial(_attn_kernel, n_heads=n_heads, dh=dh,
                          scale=1.0 / math.sqrt(dh)),
        out_shape=jax.ShapeDtypeStruct((B, S, H), jnp.bfloat16),
        grid=(B,),
        in_specs=[
            pl.BlockSpec((1, S, threeH), lambda b: (b, 0, 0)),
            pl.BlockSpec((1, 1, S), lambda b: (b, 0, 0)),    # mask re-read per batch, no repeat
        ],
        out_specs=pl.BlockSpec((1, S, H), lambda b: (b, 0, 0)),
        compiler_params=_cparams(("parallel",)),
    )(qkv, add_mask)


# ---------------------- pooler + classifier + softmax fusion ------------------

def _pooler_classifier_kernel(x_ref, wp_ref, bp_ref, wc_ref, bc_ref, o_ref):
    x = x_ref[...]
    pooled = jnp.tanh(jnp.dot(x, wp_ref[...], preferred_element_type=jnp.float32)
                      + bp_ref[...].astype(jnp.float32))
    # nn.Dropout in eval mode is identity.
    # TODO(synk): training-mode dropout (random mask scaled by 1/(1-p)) not applied.
    logits = (jnp.dot(pooled.astype(wc_ref.dtype), wc_ref[...],
                      preferred_element_type=jnp.float32)
              + bc_ref[...].astype(jnp.float32))
    logits = logits - jnp.max(logits, axis=1, keepdims=True)
    e = jnp.exp(logits)
    o_ref[...] = (e / jnp.sum(e, axis=1, keepdims=True)).astype(o_ref.dtype)


def pooler_classifier_softmax(cls_tok, wp, bp, wc, bc):
    """tanh(cls @ Wp + bp) -> dropout(eval) -> @ Wc + bc -> softmax. Tiny workload."""
    B, H = cls_tok.shape
    L = wc.shape[1]
    return pl.pallas_call(
        _pooler_classifier_kernel,
        out_shape=jax.ShapeDtypeStruct((B, L), jnp.float32),
        grid=(1,),
        in_specs=[
            pl.BlockSpec((B, H), lambda i: (0, 0)),
            pl.BlockSpec((H, H), lambda i: (0, 0)),
            pl.BlockSpec((1, H), lambda i: (0, 0)),
            pl.BlockSpec((H, L), lambda i: (0, 0)),
            pl.BlockSpec((1, L), lambda i: (0, 0)),
        ],
        out_specs=pl.BlockSpec((B, L), lambda i: (0, 0)),
        compiler_params=_cparams(("arbitrary",)),
    )(cls_tok, wp, bp, wc, bc)


# ------------------------------ model (JAX glue) -------------------------------

def init_params(key, *, vocab=50, max_pos=32, hidden=32, num_heads=2,
                intermediate=64, num_layers=2, num_labels=4):
    wdt = jnp.bfloat16

    def nrm(k, shape, dtype=wdt):
        return (0.02 * jax.random.normal(k, shape, dtype=jnp.float32)).astype(dtype)

    keys = jax.random.split(key, 3 + 6 * num_layers + 2)
    ki = iter(keys)
    params = {
        "word_emb": nrm(next(ki), (vocab, hidden), jnp.float32),
        "pos_emb": nrm(next(ki), (max_pos, hidden), jnp.float32),
        "type_emb": nrm(next(ki), (2, hidden), jnp.float32),
        "emb_ln_g": jnp.ones((1, hidden), jnp.float32),
        "emb_ln_b": jnp.zeros((1, hidden), jnp.float32),
        "layers": [],
        "num_heads": num_heads,
    }
    for _ in range(num_layers):
        wq = nrm(next(ki), (hidden, hidden))
        wk = nrm(next(ki), (hidden, hidden))
        wv = nrm(next(ki), (hidden, hidden))
        layer = {
            # fused QKV: one (H, 3H) weight -> x is read from HBM once, wider N tile
            "wqkv": jnp.concatenate([wq, wk, wv], axis=1),
            "bqkv": jnp.zeros((1, 3 * hidden), jnp.float32),
            "wo": nrm(next(ki), (hidden, hidden)),
            "bo": jnp.zeros((1, hidden), jnp.float32),
            "ln1_g": jnp.ones((1, hidden), jnp.float32),
            "ln1_b": jnp.zeros((1, hidden), jnp.float32),
            "w1": nrm(next(ki), (hidden, intermediate)),
            "b1": jnp.zeros((1, intermediate), jnp.float32),
            "w2": nrm(next(ki), (intermediate, hidden)),
            "b2": jnp.zeros((1, hidden), jnp.float32),
            "ln2_g": jnp.ones((1, hidden), jnp.float32),
            "ln2_b": jnp.zeros((1, hidden), jnp.float32),
        }
        params["layers"].append(layer)
    params["pooler_w"] = nrm(next(ki), (hidden, hidden))
    params["pooler_b"] = jnp.zeros((1, hidden), jnp.float32)
    params["cls_w"] = nrm(next(ki), (hidden, num_labels))
    params["cls_b"] = jnp.zeros((1, num_labels), jnp.float32)
    return params


def encoder_layer(x, p, add_mask, B, S, n_heads):
    H = x.shape[1]
    qkv = linear(x, p["wqkv"], p["bqkv"])                         # (B*S, 3H) bf16
    ctx = attention(qkv.reshape(B, S, 3 * H), add_mask, n_heads)  # (B, S, H)
    ctx = ctx.reshape(B * S, H)
    # wo-projection + bias + residual + LayerNorm fused (no standalone LN pass)
    x = linear_residual_layernorm(ctx, p["wo"], p["bo"], x, p["ln1_g"], p["ln1_b"])
    ff = linear(x, p["w1"], p["b1"], activation="gelu")
    x = linear_residual_layernorm(ff, p["w2"], p["b2"], x, p["ln2_g"], p["ln2_b"])
    return x


def bert_classifier_forward(params, input_ids, attention_mask, token_type_ids):
    B, S = input_ids.shape
    H = params["word_emb"].shape[1]
    n_heads = params["num_heads"]

    # Embedding gathers are glue; LayerNorm is a Pallas kernel.
    x = (jnp.take(params["word_emb"], input_ids, axis=0)
         + params["pos_emb"][None, :S, :]
         + jnp.take(params["type_emb"], token_type_ids, axis=0))
    x = x.reshape(B * S, H).astype(jnp.bfloat16)
    x = layernorm(x, params["emb_ln_g"], params["emb_ln_b"])

    # HF-BERT additive mask; consumed per-batch via BlockSpec (no jnp.repeat over heads).
    add_mask = ((1.0 - attention_mask.astype(jnp.float32)) * -10000.0).reshape(B, 1, S)

    for layer_params in params["layers"]:
        x = encoder_layer(x, layer_params, add_mask, B, S, n_heads)

    cls_tok = x.reshape(B, S, H)[:, 0, :]                         # [CLS] token
    return pooler_classifier_softmax(cls_tok, params["pooler_w"], params["pooler_b"],
                                     params["cls_w"], params["cls_b"])


# ------------------------------------ main -------------------------------------

if __name__ == "__main__":
    key = jax.random.PRNGKey(0)
    pkey, dkey1, dkey2 = jax.random.split(key, 3)

    B, S = 2, 8
    VOCAB, NUM_LABELS = 50, 4

    params = init_params(pkey, vocab=VOCAB, max_pos=32, hidden=32, num_heads=2,
                         intermediate=64, num_layers=2, num_labels=NUM_LABELS)

    input_ids = jax.random.randint(dkey1, (B, S), 0, VOCAB, dtype=jnp.int32)
    attention_mask = jnp.ones((B, S), jnp.int32).at[1, 6:].set(0)   # pad tail of sample 1
    token_type_ids = jnp.zeros((B, S), jnp.int32).at[:, S // 2:].set(1)

    probs = bert_classifier_forward(params, input_ids, attention_mask, token_type_ids)
    probs = jax.block_until_ready(probs)

    assert probs.shape == (B, NUM_LABELS)
    assert bool(jnp.all(jnp.isfinite(probs)))
    assert bool(jnp.allclose(jnp.sum(probs, axis=1), 1.0, atol=1e-5))
    print("KERNEL_OK")
</pallas_src>

<mosaic_0001>
module attributes {stable_mosaic.version = 11 : i64} {
  func.func @_layernorm_kernel(%arg0: i32, %arg1: memref<16x32xbf16, #tpu.memory_space<vmem>>, %arg2: memref<1x32xf32, #tpu.memory_space<vmem>>, %arg3: memref<1x32xf32, #tpu.memory_space<vmem>>, %arg4: memref<16x32xbf16, #tpu.memory_space<vmem>>) attributes {dimension_semantics = [#tpu.dimension_semantics<parallel>], iteration_bounds = array<i64: 1>, scalar_prefetch = 0 : i64, scratch_operands = 0 : i64, tpu.core_type = #tpu.core_type<tc>, window_params = [{transform_indices = @transform_0, window_bounds = array<i64: 16, 32>}, {pipeline_mode = #tpu.pipeline_mode<synchronous>, transform_indices = @transform_1, window_bounds = array<i64: 1, 32>}, {pipeline_mode = #tpu.pipeline_mode<synchronous>, transform_indices = @transform_2, window_bounds = array<i64: 1, 32>}, {transform_indices = @transform_3, window_bounds = array<i64: 16, 32>}]} {
    %c0 = arith.constant 0 : index
    %c0_0 = arith.constant 0 : index
    %0 = vector.load %arg1[%c0, %c0_0] : memref<16x32xbf16, #tpu.memory_space<vmem>>, vector<16x32xbf16>
    %1 = arith.extf %0 : vector<16x32xbf16> to vector<16x32xf32>
    %cst = arith.constant dense<0.000000e+00> : vector<16xf32>
    %2 = vector.multi_reduction <add>, %1, %cst [1] : vector<16x32xf32> to vector<16xf32>
    %3 = vector.shape_cast %2 : vector<16xf32> to vector<16x1xf32>
    %cst_1 = arith.constant 3.200000e+01 : f32
    %4 = vector.broadcast %cst_1 : f32 to vector<16x1xf32>
    %5 = arith.divf %3, %4 : vector<16x1xf32>
    %6 = vector.broadcast %5 : vector<16x1xf32> to vector<16x32xf32>
    %7 = arith.subf %1, %6 : vector<16x32xf32>
    %8 = arith.mulf %7, %7 : vector<16x32xf32>
    %cst_2 = arith.constant dense<0.000000e+00> : vector<16xf32>
    %9 = vector.multi_reduction <add>, %8, %cst_2 [1] : vector<16x32xf32> to vector<16xf32>
    %10 = vector.shape_cast %9 : vector<16xf32> to vector<16x1xf32>
    %cst_3 = arith.constant 3.200000e+01 : f32
    %11 = vector.broadcast %cst_3 : f32 to vector<16x1xf32>
    %12 = arith.divf %10, %11 : vector<16x1xf32>
    %13 = vector.broadcast %5 : vector<16x1xf32> to vector<16x32xf32>
    %14 = arith.subf %1, %13 : vector<16x32xf32>
    %cst_4 = arith.constant 9.99999996E-13 : f32
    %15 = vector.broadcast %cst_4 : f32 to vector<16x1xf32>
    %16 = arith.addf %12, %15 : vector<16x1xf32>
    %17 = math.rsqrt %16 : vector<16x1xf32>
    %18 = vector.broadcast %17 : vector<16x1xf32> to vector<16x32xf32>
    %19 = arith.mulf %14, %18 : vector<16x32xf32>
    %c0_5 = arith.constant 0 : index
    %c0_6 = arith.constant 0 : index
    %20 = vector.load %arg2[%c0_5, %c0_6] : memref<1x32xf32, #tpu.memory_space<vmem>>, vector<1x32xf32>
    %21 = vector.broadcast %20 : vector<1x32xf32> to vector<16x32xf32>
    %22 = arith.mulf %19, %21 : vector<16x32xf32>
    %c0_7 = arith.constant 0 : index
    %c0_8 = arith.constant 0 : index
    %23 = vector.load %arg3[%c0_7, %c0_8] : memref<1x32xf32, #tpu.memory_space<vmem>>, vector<1x32xf32>
    %24 = vector.broadcast %23 : vector<1x32xf32> to vector<16x32xf32>
    %25 = arith.addf %22, %24 : vector<16x32xf32>
    %26 = arith.truncf %25 : vector<16x32xf32> to vector<16x32xbf16>
    %c0_9 = arith.constant 0 : index
    %c0_10 = arith.constant 0 : index
    %27 = vector.load %arg4[%c0_9, %c0_10] : memref<16x32xbf16, #tpu.memory_space<vmem>>, vector<16x32xbf16>
    tpu.vector_store %arg4[%c0_9, %c0_10], %26 {strides = array<i32>} : memref<16x32xbf16, #tpu.memory_space<vmem>>, vector<16x32xbf16>,
    return
  }
  func.func @transform_0(%arg0: i32) -> (i32, i32) {
    %c0_i32 = arith.constant 0 : i32
    %c0_i32_0 = arith.constant 0 : i32
    return %arg0, %c0_i32 : i32, i32
  }
  func.func @transform_1(%arg0: i32) -> (i32, i32) {
    %c0_i32 = arith.constant 0 : i32
    %c0_i32_0 = arith.constant 0 : i32
    %c0_i32_1 = arith.constant 0 : i32
    return %c0_i32, %c0_i32_0 : i32, i32
  }
  func.func @transform_2(%arg0: i32) -> (i32, i32) {
    %c0_i32 = arith.constant 0 : i32
    %c0_i32_0 = arith.constant 0 : i32
    %c0_i32_1 = arith.constant 0 : i32
    return %c0_i32, %c0_i32_0 : i32, i32
  }
  func.func @transform_3(%arg0: i32) -> (i32, i32) {
    %c0_i32 = arith.constant 0 : i32
    %c0_i32_0 = arith.constant 0 : i32
    return %arg0, %c0_i32 : i32, i32
  }
}

</mosaic_0001>

<llo_original>
// kernel: tpu_custom_call.1
$region0: #{tpu_custom_call.1}
  #allocation0 [shape = 'u32[]', space=smem, size = 0x4, offset = 0x4, fixed_abs, tag = 'smem constant byte address 0x4 - core index']
  #allocation1 [shape = 'u32[144,128]{1,0:T(1,128)}', space=vmem, size = 0x12000, scoped, tag = 'internal scratch']
  %s0 = inlined_call_operand.hbm [shape: bf16[16,32], index: 0, kind: input, shape index: {}]
  %s1 = inlined_call_operand.vmem [shape: f32[1,32], index: 1, kind: input, shape index: {}]
  %s2 = inlined_call_operand.vmem [shape: f32[1,32], index: 2, kind: input, shape index: {}]
  %s3 = inlined_call_operand.hbm [shape: bf16[16,32], index: 3, kind: output, shape index: {}]
  %s4 = sld [smem:[#allocation0]]
  $region26: #{tpu_custom_call.1} parent=0
    _
  %s6 = ssub.s32 1, %s4
  %s7 = scalar_select 0, %s6, %s4
  $region1: #{tpu_custom_call.1} parent=0
    #allocation2 [shape = 'u8[4096]{0}', space=vmem, size = 0x1000, scoped, tag = 'input window, operand 0, single buffered']
    #allocation3 [shape = 's32[1]{0}', space=sflag, size = 0x4, scoped, tag = 'scoped memory for tpu_custom_call.1']
    #allocation4 [shape = 's32[1]{0}', space=sflag, size = 0x4, scoped, tag = 'scoped memory for tpu_custom_call.1']
    #allocation5 [shape = 'u8[4096]{0}', space=vmem, size = 0x1000, scoped, tag = 'output window, operand 0, single buffered']
    %8 = vsyncpa [#allocation3], 0
    %9 = vsyncpa [#allocation4], 0
    // Predicated region
    $region2: #{tpu_custom_call.1} parent=1 // pred_check
      _
    $region3: #{tpu_custom_call.1} parent=1 // pred_check_branch
      %11 = sbr.rel (0) target = $region5
    $region4: #{tpu_custom_call.1} parent=1 // pred_region
      %s13 = ssub.s32 128, 128
      %14 = vsyncadd [#allocation3], %s13
      %s15 = sshll.u32 [#allocation2], 4
      %s16 = int_to_ptr.vmem [resolvable:$true] %s15
      %21 = dma.hbm_to_vmem [thread:$0]  %s0, 128, %s16, [#allocation3], 64, 64, 4
    $region5: #{tpu_custom_call.1} parent=1 // pred_fallthru
      _
    // Predicated region
    $region6: #{tpu_custom_call.1} parent=1 // pred_check
      _
    $region7: #{tpu_custom_call.1} parent=1 // pred_check_branch
      %23 = sbr.rel (0) target = $region9
    $region8: #{tpu_custom_call.1} parent=1 // pred_region
      _
    $region9: #{tpu_custom_call.1} parent=1 // pred_fallthru
      _
    // Predicated region
    $region10: #{tpu_custom_call.1} parent=1 // pred_check
      _
    $region11: #{tpu_custom_call.1} parent=1 // pred_check_branch
      %25 = sbr.rel (0) target = $region13
    $region12: #{tpu_custom_call.1} parent=1 // pred_region
      _
    $region13: #{tpu_custom_call.1} parent=1 // pred_fallthru
      _
    // Predicated region
    $region14: #{tpu_custom_call.1} parent=1 // pred_check
      _
    $region15: #{tpu_custom_call.1} parent=1 // pred_check_branch
      %27 = sbr.rel (0) target = $region17
    $region16: #{tpu_custom_call.1} parent=1 // pred_region
      %28 = dma.done [#allocation3], 128
    $region17: #{tpu_custom_call.1} parent=1 // pred_fallthru
      _
    %v29 = vld [vmem:[#allocation2] sm:$0xf]
    %v30 = vld [vmem:[#allocation2 + $0x4] sm:$0xf]
    %v31 = vunpack.c.l.bf16 %v29
    %v32 = vunpack.c.l.bf16 %v30
    %vm33 = vcmask 261120
    %v34 = vsel %vm33, %v31, 0.0
    %35 = vadd.xlane.f32.xlu0 %v34
    %v36 = vpop.xlane.xlu0 %35
    %v37 = vsel %vm33, %v32, 0.0
    %38 = vadd.xlane.f32.xlu0 %v37
    %v39 = vpop.xlane.xlu0 %38
    %v40 = vrcp.pop 32.0
    %v41 = vmul.f32 %v36, %v40
    %v42 = vmul.f32 %v39, %v40
    %v43 = vsub.f32 %v31, %v41
    %v44 = vsub.f32 %v32, %v42
    %v45 = vmul.f32 %v43, %v43
    %v46 = vmul.f32 %v44, %v44
    %v47 = vsel %vm33, %v45, 0.0
    %48 = vadd.xlane.f32.xlu0 %v47
    %v49 = vpop.xlane.xlu0 %48
    %v50 = vsel %vm33, %v46, 0.0
    %51 = vadd.xlane.f32.xlu0 %v50
    %v52 = vpop.xlane.xlu0 %51
    %v53 = vmul.f32 %v49, %v40
    %v54 = vmul.f32 %v52, %v40
    %v55 = vadd.f32 %v53, 1e-12
    %v56 = vadd.f32 %v54, 1e-12
    %v57 = vrsqrt.pop %v55
    %v58 = vrsqrt.pop %v56
    %v59 = vmul.f32 %v43, %v57
    %v60 = vmul.f32 %v44, %v58
    %v61 = vld [vmem:[%s1] sm:$0x1]
    %v63 = vlaneseq
    %v64 = vshrl.u32 %v63, 7
    %v65 = vsub.s32 0, %v64
    %v66 = vrot.slane %v61, %v65
    %v68 = vmul.f32 %v59, %v66
    %v69 = vmul.f32 %v60, %v66
    %v70 = vld [vmem:[%s2] sm:$0x1]
    %v72 = vlaneseq
    %v73 = vshrl.u32 %v72, 7
    %v74 = vsub.s32 0, %v73
    %v75 = vrot.slane %v70, %v74
    %v77 = vadd.f32 %v68, %v75
    %v78 = vadd.f32 %v69, %v75
    %v79 = vpack.c.bf16 %v78, %v77
    %v81 = vunpack.c.l.b16 %v79
    %v82 = vunpack.c.h.b16 %v79
    %v83 = vpack.c.b16 %v81, %v81
    %v84 = vpack.c.b16 %v82, %v82
    %vm87 = vcmask 257024
    %88 = vst.msk [vmem:[#allocation5] sm:$0xf] %vm87, %v83
    %89 = vst.msk [vmem:[#allocation5 + $0x4] sm:$0xf] %vm87, %v84
    // Predicated region
    $region18: #{tpu_custom_call.1} parent=1 // pred_check
      _
    $region19: #{tpu_custom_call.1} parent=1 // pred_check_branch
      %91 = sbr.rel (0) target = $region21
    $region20: #{tpu_custom_call.1} parent=1 // pred_region
      %s93 = ssub.s32 128, 128
      %94 = vsyncadd [#allocation4], %s93
      %s95 = sshll.u32 [#allocation5], 4
      %s96 = int_to_ptr.vmem [resolvable:$true] %s95
      %101 = dma.vmem_to_hbm [thread:$0]  %s96, 128, %s3, [#allocation4], 64, 64, 4
    $region21: #{tpu_custom_call.1} parent=1 // pred_fallthru
      _
    // Predicated region
    $region22: #{tpu_custom_call.1} parent=1 // pred_check
      _
    $region23: #{tpu_custom_call.1} parent=1 // pred_check_branch
      %103 = sbr.rel (0) target = $region25
    $region24: #{tpu_custom_call.1} parent=1 // pred_region
      %104 = dma.done [#allocation4], 128
    $region25: #{tpu_custom_call.1} parent=1 // pred_fallthru
      _
    %105 = vsyncpa [#allocation3], 1
    %106 = vsyncpa [#allocation4], 1

</llo_original>
